<compile_context>
chip_gen: v7x
topology: tpu7x:2x2x1
jax: 0.10.0
libtpu: 0.0.40
codegen_flags: <defaults>
</compile_context>

<pallas_src>
import functools

import jax
import jax.numpy as jnp
from jax.experimental import pallas as pl
from jax.experimental.pallas import tpu as pltpu


_MAX_TILE_ROWS = 1024    # ~85% of HBM roofline already reached at 512-row tiles
_MIN_GRID_STEPS = 4      # keep DMA pipeline + both v7x TensorCores busy
_MIN_VMEM_LIMIT = 16 * 1024 * 1024
_MAX_VMEM_LIMIT = 48 * 1024 * 1024


# ---------------------------------------------------------------------------
# Kernels
# ---------------------------------------------------------------------------
def _first_pool_kernel_2d(x_ref, out_ref):
    # x_ref: (tb, D) -- already the t=0 slice (fetched from the (B, T*D) view).
    out_ref[...] = x_ref[...].astype(out_ref.dtype)


def _half_pool_kernel_2d(x_ref, out_ref):
    # x_ref: (tb, D); average the two halves of the feature dim in f32.
    x = x_ref[...].astype(jnp.float32)
    d_half = out_ref.shape[-1]
    out_ref[...] = ((x[:, :d_half] + x[:, d_half:]) * 0.5).astype(out_ref.dtype)


def _first_pool_kernel_3d(x_ref, out_ref):
    # x_ref: (tb, t_blk, D); only timestep 0 is consumed.
    out_ref[...] = x_ref[:, 0, :].astype(out_ref.dtype)


def _half_pool_kernel_3d(x_ref, out_ref):
    x = x_ref[:, 0, :].astype(jnp.float32)
    d_half = out_ref.shape[-1]
    out_ref[...] = ((x[:, :d_half] + x[:, d_half:]) * 0.5).astype(out_ref.dtype)


# ---------------------------------------------------------------------------
# Tiling helpers
# ---------------------------------------------------------------------------
@functools.cache
def _vmem_tile_budget_bytes():
    """Generation-aware budget for the double-buffered in+out tiles."""
    try:
        cap = int(pltpu.get_tpu_info().vmem_capacity_bytes)
    except Exception:  # noqa: BLE001 -- conservative default (v7x: 64 MiB)
        cap = 64 * 1024 * 1024
    # ~1/4 of physical VMEM, clamped to [8 MiB, 32 MiB]:
    # v7x (64 MiB) -> 16 MiB, v5e/v6e (128 MiB) -> 32 MiB.
    return int(min(max(cap // 4, 8 * 1024 * 1024), 32 * 1024 * 1024))


def _sublane_pack(dtype):
    """Sublane packing for the batch (second-minor) dim: f32->8, bf16->16, i8->32."""
    return max(8, 32 // max(jnp.dtype(dtype).itemsize, 1))


def _pick_batch_block(batch, row_bytes, dtype):
    """Batch tile: packing-aligned, within the VMEM budget, <= 1024 rows, and
    small enough for >= _MIN_GRID_STEPS grid steps when the batch allows."""
    pack = _sublane_pack(dtype)
    budget_rows = _vmem_tile_budget_bytes() // max(row_bytes, 1)
    cap = max(pack, min(budget_rows, _MAX_TILE_ROWS))
    target = pl.cdiv(batch, _MIN_GRID_STEPS)          # rows/tile for >= min steps
    tb = max(pack, min(cap, target))
    tb = (tb // pack) * pack
    if tb <= 0 or tb >= batch:
        return batch                                   # full batch in one tile
    return tb


# ---------------------------------------------------------------------------
# Wrapper (equivalent of TemporalFirstPool.forward(features, _, __))
# ---------------------------------------------------------------------------
def temporal_first_pool(features, unused_a=None, unused_b=None, *, half_pool=False):
    B, T, D = features.shape
    dtype = features.dtype
    itemsize = jnp.dtype(dtype).itemsize

    if half_pool:
        assert D % 2 == 0, "half_pool requires an even feature dimension"
        out_d = D // 2
    else:
        out_d = D

    use_2d = (D % 128 == 0) or (T == 1)

    if use_2d:
        # Free row-major view; block (tb, D) at column-block 0 == features[:, 0, :].
        operand = features.reshape(B, T * D)
        kernel = _half_pool_kernel_2d if half_pool else _first_pool_kernel_2d
        row_in_bytes = D * itemsize

        def make_in_spec(tb):
            return pl.BlockSpec((tb, D), lambda i: (i, 0))
    else:
        # Fallback: D not 128-aligned and T > 1 -> fetch first (<=8) timesteps.
        t_blk = T if T <= 8 else 8
        operand = features
        kernel = _half_pool_kernel_3d if half_pool else _first_pool_kernel_3d
        row_in_bytes = t_blk * D * itemsize

        def make_in_spec(tb):
            return pl.BlockSpec((tb, t_blk, D), lambda i: (i, 0, 0))

    # Double-buffered input + output bytes per batch row.
    row_bytes = 2 * (row_in_bytes + out_d * itemsize)
    tb = _pick_batch_block(B, row_bytes, dtype)
    grid = (pl.cdiv(B, tb),)

    working_set = tb * row_bytes
    vmem_limit = int(min(max(working_set + (8 << 20), _MIN_VMEM_LIMIT),
                         _MAX_VMEM_LIMIT))
    compiler_params = pltpu.CompilerParams(
        dimension_semantics=("parallel",),   # v7x: shard batch tiles over both TCs
        vmem_limit_bytes=vmem_limit,
    )

    return pl.pallas_call(
        kernel,
        out_shape=jax.ShapeDtypeStruct((B, out_d), dtype),
        grid=grid,
        in_specs=[make_in_spec(tb)],
        out_specs=pl.BlockSpec((tb, out_d), lambda i: (i, 0)),
        compiler_params=compiler_params,
    )(operand)


# ---------------------------------------------------------------------------
# Self-test
# ---------------------------------------------------------------------------
if __name__ == "__main__":
    key = jax.random.PRNGKey(0)
    k1, k2, k3 = jax.random.split(key, 3)

    # 1) Lane-aligned hidden dim -> 2D fast path (batch=2, seq=8, hidden=256).
    B, T, D = 2, 8, 256
    feats = jax.random.normal(k1, (B, T, D), dtype=jnp.float32)

    out = jax.block_until_ready(
        temporal_first_pool(feats, None, None, half_pool=False))
    ref = feats[:, 0, :]
    assert out.shape == (B, D)
    assert jnp.allclose(out, ref, atol=1e-6), "mismatch (2D, half_pool=False)"

    out_h = jax.block_until_ready(
        temporal_first_pool(feats, None, None, half_pool=True))
    ref_h = feats[:, 0, :].reshape(-1, 2, D // 2).mean(axis=1)
    assert out_h.shape == (B, D // 2)
    assert jnp.allclose(out_h, ref_h, atol=1e-6), "mismatch (2D, half_pool=True)"

    # 2) Non-128-aligned hidden dim -> 3D fallback path (hidden=32).
    B2, T2, D2 = 2, 8, 32
    feats2 = jax.random.normal(k2, (B2, T2, D2), dtype=jnp.float32)

    out2 = jax.block_until_ready(
        temporal_first_pool(feats2, None, None, half_pool=False))
    assert jnp.allclose(out2, feats2[:, 0, :], atol=1e-6), "mismatch (3D, half_pool=False)"

    out2_h = jax.block_until_ready(
        temporal_first_pool(feats2, None, None, half_pool=True))
    ref2_h = feats2[:, 0, :].reshape(-1, 2, D2 // 2).mean(axis=1)
    assert jnp.allclose(out2_h, ref2_h, atol=1e-6), "mismatch (3D, half_pool=True)"

    # 3) bf16 with a batch large enough for multiple grid steps
    #    (exercises packing-aligned tb=16 and the multi-tile pipeline).
    B3, T3, D3 = 64, 4, 128
    feats3 = jax.random.normal(k3, (B3, T3, D3), dtype=jnp.float32).astype(jnp.bfloat16)
    out3 = jax.block_until_ready(
        temporal_first_pool(feats3, None, None, half_pool=False))
    assert out3.shape == (B3, D3)
    assert jnp.array_equal(out3, feats3[:, 0, :]), "mismatch (bf16, multi-tile)"

    print("KERNEL_OK")
</pallas_src>

<mosaic_0001>
module attributes {stable_mosaic.version = 11 : i64} {
  func.func @_first_pool_kernel_2d(%arg0: i32, %arg1: memref<2x256xf32, #tpu.memory_space<vmem>>, %arg2: memref<2x256xf32, #tpu.memory_space<vmem>>) attributes {dimension_semantics = [#tpu.dimension_semantics<parallel>], iteration_bounds = array<i64: 1>, scalar_prefetch = 0 : i64, scratch_operands = 0 : i64, tpu.core_type = #tpu.core_type<tc>, window_params = [{transform_indices = @transform_0, window_bounds = array<i64: 2, 256>}, {transform_indices = @transform_1, window_bounds = array<i64: 2, 256>}]} {
    %c0 = arith.constant 0 : index
    %c0_0 = arith.constant 0 : index
    %0 = vector.load %arg1[%c0, %c0_0] : memref<2x256xf32, #tpu.memory_space<vmem>>, vector<2x256xf32>
    %c0_1 = arith.constant 0 : index
    %c0_2 = arith.constant 0 : index
    %1 = vector.load %arg2[%c0_1, %c0_2] : memref<2x256xf32, #tpu.memory_space<vmem>>, vector<2x256xf32>
    tpu.vector_store %arg2[%c0_1, %c0_2], %0 {strides = array<i32>} : memref<2x256xf32, #tpu.memory_space<vmem>>, vector<2x256xf32>,
    return
  }
  func.func @transform_0(%arg0: i32) -> (i32, i32) {
    %c0_i32 = arith.constant 0 : i32
    %c0_i32_0 = arith.constant 0 : i32
    return %arg0, %c0_i32 : i32, i32
  }
  func.func @transform_1(%arg0: i32) -> (i32, i32) {
    %c0_i32 = arith.constant 0 : i32
    %c0_i32_0 = arith.constant 0 : i32
    return %arg0, %c0_i32 : i32, i32
  }
}

</mosaic_0001>

<llo_original>
// kernel: tpu_custom_call.1
$region0: #{tpu_custom_call.1}
  #allocation0 [shape = 'u32[]', space=smem, size = 0x4, offset = 0x4, fixed_abs, tag = 'smem constant byte address 0x4 - core index']
  #allocation1 [shape = 'u32[144,128]{1,0:T(1,128)}', space=vmem, size = 0x12000, scoped, tag = 'internal scratch']
  %s0 = inlined_call_operand.hbm [shape: f32[2,2048], index: 0, kind: input, shape index: {}]
  %s1 = inlined_call_operand.hbm [shape: f32[2,256], index: 1, kind: output, shape index: {}]
  %s2 = sld [smem:[#allocation0]]
  $region18: #{tpu_custom_call.1} parent=0
    _
  %s4 = ssub.s32 1, %s2
  %s5 = scalar_select 0, %s4, %s2
  $region1: #{tpu_custom_call.1} parent=0
    #allocation2 [shape = 'u8[2048]{0}', space=vmem, size = 0x800, scoped, tag = 'input window, operand 0, single buffered']
    #allocation3 [shape = 's32[1]{0}', space=sflag, size = 0x4, scoped, tag = 'scoped memory for tpu_custom_call.1']
    #allocation4 [shape = 's32[1]{0}', space=sflag, size = 0x4, scoped, tag = 'scoped memory for tpu_custom_call.1']
    #allocation5 [shape = 'u8[2048]{0}', space=vmem, size = 0x800, scoped, tag = 'output window, operand 0, single buffered']
    %6 = vsyncpa [#allocation3], 0
    %7 = vsyncpa [#allocation4], 0
    // Predicated region
    $region2: #{tpu_custom_call.1} parent=1 // pred_check
      _
    $region3: #{tpu_custom_call.1} parent=1 // pred_check_branch
      %9 = sbr.rel (0) target = $region5
    $region4: #{tpu_custom_call.1} parent=1 // pred_region
      %s11 = ssub.s32 64, 64
      %12 = vsyncadd [#allocation3], %s11
      %s14 = sshll.u32 [#allocation2], 4
      %s15 = int_to_ptr.vmem [resolvable:$true] %s14
      %17 = dma.hbm_to_vmem [thread:$0]  %s0, 64, %s15, [#allocation3]
    $region5: #{tpu_custom_call.1} parent=1 // pred_fallthru
      _
    // Predicated region
    $region6: #{tpu_custom_call.1} parent=1 // pred_check
      _
    $region7: #{tpu_custom_call.1} parent=1 // pred_check_branch
      %19 = sbr.rel (0) target = $region9
    $region8: #{tpu_custom_call.1} parent=1 // pred_region
      %20 = dma.done [#allocation3], 64
    $region9: #{tpu_custom_call.1} parent=1 // pred_fallthru
      _
    %v21 = vld [vmem:[#allocation2] sm:$0xf]
    %22 = vst [vmem:[#allocation5] sm:$0xf] %v21
    // Predicated region
    $region10: #{tpu_custom_call.1} parent=1 // pred_check
      _
    $region11: #{tpu_custom_call.1} parent=1 // pred_check_branch
      %24 = sbr.rel (0) target = $region13
    $region12: #{tpu_custom_call.1} parent=1 // pred_region
      %s26 = ssub.s32 64, 64
      %27 = vsyncadd [#allocation4], %s26
      %s29 = sshll.u32 [#allocation5], 4
      %s30 = int_to_ptr.vmem [resolvable:$true] %s29
      %32 = dma.vmem_to_hbm [thread:$0]  %s30, 64, %s1, [#allocation4]
    $region13: #{tpu_custom_call.1} parent=1 // pred_fallthru
      _
    // Predicated region
    $region14: #{tpu_custom_call.1} parent=1 // pred_check
      _
    $region15: #{tpu_custom_call.1} parent=1 // pred_check_branch
      %34 = sbr.rel (0) target = $region17
    $region16: #{tpu_custom_call.1} parent=1 // pred_region
      %35 = dma.done [#allocation4], 64
    $region17: #{tpu_custom_call.1} parent=1 // pred_fallthru
      _
    %36 = vsyncpa [#allocation3], 1
    %37 = vsyncpa [#allocation4], 1

</llo_original>
